<compile_context>
chip_gen: v6e
topology: v6e:2x2x1
jax: 0.10.0
libtpu: 0.0.40
codegen_flags: <defaults>
</compile_context>

<pallas_src>
import functools

import jax
import jax.numpy as jnp
from jax.experimental import pallas as pl
from jax.experimental.pallas import tpu as pltpu


def _round_up(x, m):
    return (x + m - 1) // m * m


def _vmem_capacity_bytes():
    try:
        cap = int(pltpu.get_tpu_info().vmem_capacity_bytes)
        if cap > 0:
            return cap
    except Exception:
        pass
    return 64 << 20  # conservative fallback: v7x per-TensorCore VMEM


_VMEM_CAP = _vmem_capacity_bytes()


# ---------------------------------------------------------------------------
# Kernels
# ---------------------------------------------------------------------------
def _resident_kernel(x_ref, w1_ref, b1_ref, w2_ref, b2_ref, o_ref):
    """Weights fully resident in VMEM; one batch tile per grid step."""
    x = x_ref[...]                                    # [TB, Fp] f32 (residual)
    cdt = w1_ref.dtype                                # bf16 MXU feed
    h = jnp.dot(x.astype(cdt), w1_ref[...], preferred_element_type=jnp.float32)
    h = jnp.maximum(h + b1_ref[...], 0.0)             # bias + ReLU in f32
    # dropout(p=0.1): eval-mode identity
    y = jnp.dot(h.astype(cdt), w2_ref[...], preferred_element_type=jnp.float32)
    # fc2 bias and residual fused into one f32 VPU pass.
    o_ref[...] = (x + y + b2_ref[...]).astype(o_ref.dtype)


def _tiled_kernel(x_ref, w1_ref, b1_ref, w2_ref, b2_ref, o_ref, acc_ref):
    """Streaming fallback for large F: fc1 tiled over output-feature blocks,
    fc2 K-reduction accumulated into an f32 VMEM scratch."""
    k = pl.program_id(1)

    @pl.when(k == 0)
    def _():
        acc_ref[...] = jnp.zeros_like(acc_ref)

    x = x_ref[...]                                    # [TB, Fp] f32
    cdt = w1_ref.dtype
    hk = jnp.dot(x.astype(cdt), w1_ref[...], preferred_element_type=jnp.float32)
    hk = jnp.maximum(hk + b1_ref[...], 0.0)           # [TB, TK]
    # dropout(p=0.1): eval-mode identity
    acc_ref[...] += jnp.dot(hk.astype(cdt), w2_ref[...],
                            preferred_element_type=jnp.float32)

    @pl.when(k == pl.num_programs(1) - 1)
    def _():
        o_ref[...] = (x + acc_ref[...] + b2_ref[...]).astype(o_ref.dtype)


# ---------------------------------------------------------------------------
# Wrappers
# ---------------------------------------------------------------------------
def prepare_params(w1, b1, w2, b2, compute_dtype=jnp.bfloat16):
    """One-time weight preparation (hoisted out of the per-call jit path):
    pre-transpose to [in, out], zero-pad features to a multiple of 128, cast
    weights to the MXU compute dtype.  Biases stay f32 (added post-accum)."""
    F = w1.shape[1]
    Fp = _round_up(F, 128)
    pad2 = ((0, Fp - F), (0, Fp - F))
    w1t = jnp.pad(jnp.asarray(w1, jnp.float32).T, pad2).astype(compute_dtype)
    w2t = jnp.pad(jnp.asarray(w2, jnp.float32).T, pad2).astype(compute_dtype)
    b1p = jnp.pad(jnp.asarray(b1, jnp.float32), (0, Fp - F)).reshape(1, Fp)
    b2p = jnp.pad(jnp.asarray(b2, jnp.float32), (0, Fp - F)).reshape(1, Fp)
    return w1t, b1p, w2t, b2p


@functools.partial(jax.jit, static_argnames=("block_b", "block_k", "force_tiled"))
def residual_block(x, w1t, b1p, w2t, b2p, *, block_b=None, block_k=512,
                   force_tiled=False):
    """y = x + fc2(relu(fc1(x))) using params from prepare_params()."""
    B, F = x.shape
    Fp = w1t.shape[0]
    orig_dtype = x.dtype
    f32 = jnp.float32
    cap = _VMEM_CAP
    bpf = jnp.dtype(w1t.dtype).itemsize               # bytes per weight elem

    if block_b is None:
        block_b = 512 if cap >= (100 << 20) else 256   # bigger tiles on v5e/v6e
    TB = min(block_b, _round_up(B, 8))
    Bp = _round_up(B, TB)

    padded = (Bp, Fp) != (B, F)
    if padded:
        x_p = jnp.pad(x.astype(f32), ((0, Bp - B), (0, Fp - F)))
    else:
        x_p = x.astype(f32)                            # fast path: no pad pass

    out_dtype = orig_dtype
    # Alias x's HBM buffer only when x_p is a fresh padded copy of matching dtype.
    io_alias = {0: 0} if (out_dtype == f32 and padded) else {}

    grid_b = Bp // TB
    flops = 4 * Bp * Fp * Fp                           # two matmuls
    bytes_accessed = (Bp * Fp * 4                      # x read (f32)
                      + Bp * Fp * jnp.dtype(out_dtype).itemsize   # out write
                      + 2 * Fp * Fp * bpf              # weights (compute dtype)
                      + 2 * Fp * 4)                    # biases
    cost = pl.CostEstimate(flops=flops, transcendentals=0,
                           bytes_accessed=bytes_accessed)

    headroom_cap = min(int(0.9 * cap), cap - (6 << 20))

    # Resident-weights VMEM need, incl. matmul intermediates + bf16 staging.
    resident_need = (2 * 2 * TB * Fp * 4               # x/out tiles, double-buffered
                     + 2 * Fp * Fp * bpf               # W1t + W2t, single-buffered
                     + 2 * Fp * 4                      # biases
                     + 2 * TB * Fp * 4                 # h, y (f32)
                     + 2 * TB * Fp * bpf)              # bf16 copies of x, h
    use_tiled = force_tiled or (resident_need + (8 << 20) > int(0.75 * cap))

    if not use_tiled:
        vmem_limit = int(max(min(resident_need + (8 << 20), headroom_cap),
                             16 << 20))
        out_p = pl.pallas_call(
            _resident_kernel,
            out_shape=jax.ShapeDtypeStruct((Bp, Fp), out_dtype),
            grid_spec=pltpu.PrefetchScalarGridSpec(
                num_scalar_prefetch=0,
                grid=(grid_b,),
                in_specs=[
                    pl.BlockSpec((TB, Fp), lambda i: (i, 0)),            # x
                    pl.BlockSpec((Fp, Fp), lambda i: (0, 0),
                                 pipeline_mode=pl.Buffered(1)),          # W1t
                    pl.BlockSpec((1, Fp), lambda i: (0, 0),
                                 pipeline_mode=pl.Buffered(1)),          # b1
                    pl.BlockSpec((Fp, Fp), lambda i: (0, 0),
                                 pipeline_mode=pl.Buffered(1)),          # W2t
                    pl.BlockSpec((1, Fp), lambda i: (0, 0),
                                 pipeline_mode=pl.Buffered(1)),          # b2
                ],
                out_specs=pl.BlockSpec((TB, Fp), lambda i: (i, 0)),
            ),
            compiler_params=pltpu.CompilerParams(
                dimension_semantics=("parallel",),
                vmem_limit_bytes=vmem_limit),
            input_output_aliases=io_alias,
            cost_estimate=cost,
        )(x_p, w1t, b1p, w2t, b2p)
    else:
        TK = min(block_k, Fp)
        grid_k = Fp // TK
        # TODO(synk): for extremely large F, also shrink TB / tile fc1's K dim.
        tiled_need = (2 * 2 * TB * Fp * 4              # x/out tiles, double-buffered
                      + TB * Fp * 4                    # f32 accumulator scratch
                      + 2 * (Fp * TK + TK * Fp) * bpf  # streamed weight blocks (2-buf)
                      + 2 * TK * 4 + Fp * 4            # biases
                      + TB * TK * 4                    # hk (f32)
                      + TB * (Fp + TK) * bpf)          # bf16 copies of x, hk
        vmem_limit = int(max(min(tiled_need + (8 << 20), headroom_cap),
                             16 << 20))
        out_p = pl.pallas_call(
            _tiled_kernel,
            out_shape=jax.ShapeDtypeStruct((Bp, Fp), out_dtype),
            grid_spec=pltpu.PrefetchScalarGridSpec(
                num_scalar_prefetch=0,
                grid=(grid_b, grid_k),
                in_specs=[
                    pl.BlockSpec((TB, Fp), lambda i, k: (i, 0)),         # x
                    pl.BlockSpec((Fp, TK), lambda i, k: (0, k)),         # W1t cols
                    pl.BlockSpec((1, TK), lambda i, k: (0, k)),          # b1 block
                    pl.BlockSpec((TK, Fp), lambda i, k: (k, 0)),         # W2t rows
                    pl.BlockSpec((1, Fp), lambda i, k: (0, 0),
                                 pipeline_mode=pl.Buffered(1)),          # b2
                ],
                out_specs=pl.BlockSpec((TB, Fp), lambda i, k: (i, 0)),
                scratch_shapes=[pltpu.VMEM((TB, Fp), jnp.float32)],
            ),
            compiler_params=pltpu.CompilerParams(
                dimension_semantics=("parallel", "arbitrary"),
                vmem_limit_bytes=vmem_limit),
            input_output_aliases=io_alias,
            cost_estimate=cost,
        )(x_p, w1t, b1p, w2t, b2p)

    if padded:
        out_p = out_p[:B, :F]
    return out_p


def reference(x, w1, b1, w2, b2):
    h = jnp.maximum(x @ w1.T + b1, 0.0)
    return x + (h @ w2.T + b2)


if __name__ == "__main__":
    key = jax.random.PRNGKey(0)

    def make_params(k, F):
        k1, kb1, k2, kb2 = jax.random.split(k, 4)
        bound = 1.0 / jnp.sqrt(F)
        w1 = jax.random.uniform(k1, (F, F), minval=-bound, maxval=bound, dtype=jnp.float32)
        b1 = jax.random.uniform(kb1, (F,), minval=-bound, maxval=bound, dtype=jnp.float32)
        w2 = jax.random.uniform(k2, (F, F), minval=-bound, maxval=bound, dtype=jnp.float32)
        b2 = jax.random.uniform(kb2, (F,), minval=-bound, maxval=bound, dtype=jnp.float32)
        return w1, b1, w2, b2

    kx, kp, kx2, kp2 = jax.random.split(key, 4)

    # Small demo shape matching the module spec (num_features=32, batch=8).
    B, F = 8, 32
    x = jax.random.normal(kx, (B, F), dtype=jnp.float32)
    w1, b1, w2, b2 = make_params(kp, F)
    params = prepare_params(w1, b1, w2, b2)            # one-time weight prep
    out = jax.block_until_ready(residual_block(x, *params))
    ref = reference(x, w1, b1, w2, b2)
    assert out.shape == (B, F)
    # bf16 MXU feed -> relaxed tolerance vs the f32 reference (intentional).
    assert jnp.allclose(out, ref, atol=5e-2, rtol=5e-2), "resident-path mismatch"

    # Exercise the streamed / K-tiled fallback path (used for large F).
    B2, F2 = 64, 256
    x2 = jax.random.normal(kx2, (B2, F2), dtype=jnp.float32)
    w1b, b1b, w2b, b2b = make_params(kp2, F2)
    params2 = prepare_params(w1b, b1b, w2b, b2b)
    out2 = jax.block_until_ready(
        residual_block(x2, *params2, block_k=128, force_tiled=True))
    ref2 = reference(x2, w1b, b1b, w2b, b2b)
    assert out2.shape == (B2, F2)
    assert jnp.allclose(out2, ref2, atol=5e-2, rtol=5e-2), "tiled-path mismatch"

    print("KERNEL_OK")
</pallas_src>

<mosaic_0001>
module attributes {stable_mosaic.version = 11 : i64} {
  func.func @_resident_kernel(%arg0: i32, %arg1: memref<8x128xf32, #tpu.memory_space<vmem>>, %arg2: memref<128x128xbf16, #tpu.memory_space<vmem>>, %arg3: memref<1x128xf32, #tpu.memory_space<vmem>>, %arg4: memref<128x128xbf16, #tpu.memory_space<vmem>>, %arg5: memref<1x128xf32, #tpu.memory_space<vmem>>, %arg6: memref<8x128xf32, #tpu.memory_space<vmem>>) attributes {dimension_semantics = [#tpu.dimension_semantics<parallel>], iteration_bounds = array<i64: 1>, scalar_prefetch = 0 : i64, scratch_operands = 0 : i64, tpu.core_type = #tpu.core_type<tc>, window_params = [{transform_indices = @transform_0, window_bounds = array<i64: 8, 128>}, {pipeline_mode = #tpu.pipeline_mode<synchronous>, transform_indices = @transform_1, window_bounds = array<i64: 128, 128>}, {pipeline_mode = #tpu.pipeline_mode<synchronous>, transform_indices = @transform_2, window_bounds = array<i64: 1, 128>}, {pipeline_mode = #tpu.pipeline_mode<synchronous>, transform_indices = @transform_3, window_bounds = array<i64: 128, 128>}, {pipeline_mode = #tpu.pipeline_mode<synchronous>, transform_indices = @transform_4, window_bounds = array<i64: 1, 128>}, {transform_indices = @transform_5, window_bounds = array<i64: 8, 128>}]} {
    %c0 = arith.constant 0 : index
    %c0_0 = arith.constant 0 : index
    %0 = vector.load %arg1[%c0, %c0_0] : memref<8x128xf32, #tpu.memory_space<vmem>>, vector<8x128xf32>
    %1 = arith.truncf %0 : vector<8x128xf32> to vector<8x128xbf16>
    %c0_1 = arith.constant 0 : index
    %c0_2 = arith.constant 0 : index
    %2 = vector.load %arg2[%c0_1, %c0_2] : memref<128x128xbf16, #tpu.memory_space<vmem>>, vector<128x128xbf16>
    %cst = arith.constant dense<0.000000e+00> : vector<8x128xf32>
    %3 = tpu.matmul %1, %2, %cst {dimension_numbers = #tpu.dot_dimension_numbers<[1], [0], [0], [1], [0, 0, 1, 1], [], []>} : vector<8x128xbf16>, vector<128x128xbf16>, vector<8x128xf32> -> vector<8x128xf32>
    %c0_3 = arith.constant 0 : index
    %c0_4 = arith.constant 0 : index
    %4 = vector.load %arg3[%c0_3, %c0_4] : memref<1x128xf32, #tpu.memory_space<vmem>>, vector<1x128xf32>
    %5 = vector.broadcast %4 : vector<1x128xf32> to vector<8x128xf32>
    %6 = arith.addf %3, %5 : vector<8x128xf32>
    %cst_5 = arith.constant 0.000000e+00 : f32
    %7 = vector.broadcast %cst_5 : f32 to vector<8x128xf32>
    %8 = arith.maximumf %6, %7 : vector<8x128xf32>
    %9 = arith.truncf %8 : vector<8x128xf32> to vector<8x128xbf16>
    %c0_6 = arith.constant 0 : index
    %c0_7 = arith.constant 0 : index
    %10 = vector.load %arg4[%c0_6, %c0_7] : memref<128x128xbf16, #tpu.memory_space<vmem>>, vector<128x128xbf16>
    %cst_8 = arith.constant dense<0.000000e+00> : vector<8x128xf32>
    %11 = tpu.matmul %9, %10, %cst_8 {dimension_numbers = #tpu.dot_dimension_numbers<[1], [0], [0], [1], [0, 0, 1, 1], [], []>} : vector<8x128xbf16>, vector<128x128xbf16>, vector<8x128xf32> -> vector<8x128xf32>
    %12 = arith.addf %0, %11 : vector<8x128xf32>
    %c0_9 = arith.constant 0 : index
    %c0_10 = arith.constant 0 : index
    %13 = vector.load %arg5[%c0_9, %c0_10] : memref<1x128xf32, #tpu.memory_space<vmem>>, vector<1x128xf32>
    %14 = vector.broadcast %13 : vector<1x128xf32> to vector<8x128xf32>
    %15 = arith.addf %12, %14 : vector<8x128xf32>
    %c0_11 = arith.constant 0 : index
    %c0_12 = arith.constant 0 : index
    %16 = vector.load %arg6[%c0_11, %c0_12] : memref<8x128xf32, #tpu.memory_space<vmem>>, vector<8x128xf32>
    tpu.vector_store %arg6[%c0_11, %c0_12], %15 {strides = array<i32>} : memref<8x128xf32, #tpu.memory_space<vmem>>, vector<8x128xf32>,
    return
  }
  func.func @transform_0(%arg0: i32) -> (i32, i32) {
    %c0_i32 = arith.constant 0 : i32
    %c0_i32_0 = arith.constant 0 : i32
    return %arg0, %c0_i32 : i32, i32
  }
  func.func @transform_1(%arg0: i32) -> (i32, i32) {
    %c0_i32 = arith.constant 0 : i32
    %c0_i32_0 = arith.constant 0 : i32
    %c0_i32_1 = arith.constant 0 : i32
    return %c0_i32, %c0_i32_0 : i32, i32
  }
  func.func @transform_2(%arg0: i32) -> (i32, i32) {
    %c0_i32 = arith.constant 0 : i32
    %c0_i32_0 = arith.constant 0 : i32
    %c0_i32_1 = arith.constant 0 : i32
    return %c0_i32, %c0_i32_0 : i32, i32
  }
  func.func @transform_3(%arg0: i32) -> (i32, i32) {
    %c0_i32 = arith.constant 0 : i32
    %c0_i32_0 = arith.constant 0 : i32
    %c0_i32_1 = arith.constant 0 : i32
    return %c0_i32, %c0_i32_0 : i32, i32
  }
  func.func @transform_4(%arg0: i32) -> (i32, i32) {
    %c0_i32 = arith.constant 0 : i32
    %c0_i32_0 = arith.constant 0 : i32
    %c0_i32_1 = arith.constant 0 : i32
    return %c0_i32, %c0_i32_0 : i32, i32
  }
  func.func @transform_5(%arg0: i32) -> (i32, i32) {
    %c0_i32 = arith.constant 0 : i32
    %c0_i32_0 = arith.constant 0 : i32
    return %arg0, %c0_i32 : i32, i32
  }
}

</mosaic_0001>

<llo_original>
// kernel: residual_block.1
$region0: #{residual_block.1}
  #allocation0 [shape = 'u32[]', space=smem, size = 0x4, offset = 0x4, fixed_abs, tag = 'smem constant byte address 0x4 - core index']
  #allocation1 [shape = 'u32[144,128]{1,0:T(1,128)}', space=vmem, size = 0x12000, scoped, tag = 'internal scratch']
  %s0 = inlined_call_operand.vmem [shape: f32[8,128], index: 0, kind: input, shape index: {}, may-alias: {0,5}]
  %s1 = inlined_call_operand.hbm [shape: bf16[128,128], index: 1, kind: input, shape index: {}]
  %s2 = inlined_call_operand.vmem [shape: f32[1,128], index: 2, kind: input, shape index: {}]
  %s3 = inlined_call_operand.hbm [shape: bf16[128,128], index: 3, kind: input, shape index: {}]
  %s4 = inlined_call_operand.vmem [shape: f32[1,128], index: 4, kind: input, shape index: {}]
  %s5 = inlined_call_operand.vmem [shape: f32[8,128], index: 5, kind: output, shape index: {}, may-alias: {0,5}]
  %s6 = sld [smem:[#allocation0]]
  $region38: #{residual_block.1} parent=0
    _
  %s8 = ssub.s32 1, %s6
  %s9 = scalar_select 0, %s8, %s6
  $region1: #{residual_block.1} parent=0
    #allocation2 [shape = 'u8[32768]{0}', space=vmem, size = 0x8000, scoped, tag = 'input window, operand 1, single buffered']
    #allocation3 [shape = 's32[1]{0}', space=sflag, size = 0x4, scoped, tag = 'scoped memory for residual_block.1']
    #allocation4 [shape = 'u8[32768]{0}', space=vmem, size = 0x8000, scoped, tag = 'input window, operand 3, single buffered']
    #allocation5 [shape = 's32[1]{0}', space=sflag, size = 0x4, scoped, tag = 'scoped memory for residual_block.1']
    %10 = vsyncpa [#allocation3], 0
    %11 = vsyncpa [#allocation5], 0
    // Predicated region
    $region2: #{residual_block.1} parent=1 // pred_check
      _
    $region3: #{residual_block.1} parent=1 // pred_check_branch
      %13 = sbr.rel (0) target = $region5
    $region4: #{residual_block.1} parent=1 // pred_region
      _
    $region5: #{residual_block.1} parent=1 // pred_fallthru
      _
    // Predicated region
    $region6: #{residual_block.1} parent=1 // pred_check
      _
    $region7: #{residual_block.1} parent=1 // pred_check_branch
      %15 = sbr.rel (0) target = $region9
    $region8: #{residual_block.1} parent=1 // pred_region
      %s17 = ssub.s32 1024, 1024
      %18 = vsyncadd [#allocation3], %s17
      %s19 = sshll.u32 [#allocation2], 4
      %s20 = int_to_ptr.vmem [resolvable:$true] %s19
      %25 = dma.hbm_to_vmem [thread:$0]  %s1, 1024, %s20, [#allocation3], 64, 64, 4
    $region9: #{residual_block.1} parent=1 // pred_fallthru
      _
    // Predicated region
    $region10: #{residual_block.1} parent=1 // pred_check
      _
    $region11: #{residual_block.1} parent=1 // pred_check_branch
      %27 = sbr.rel (0) target = $region13
    $region12: #{residual_block.1} parent=1 // pred_region
      _
    $region13: #{residual_block.1} parent=1 // pred_fallthru
      _
    // Predicated region
    $region14: #{residual_block.1} parent=1 // pred_check
      _
    $region15: #{residual_block.1} parent=1 // pred_check_branch
      %29 = sbr.rel (0) target = $region17
    $region16: #{residual_block.1} parent=1 // pred_region
      %s31 = ssub.s32 1024, 1024
      %32 = vsyncadd [#allocation5], %s31
      %s33 = sshll.u32 [#allocation4], 4
      %s34 = int_to_ptr.vmem [resolvable:$true] %s33
      %39 = dma.hbm_to_vmem [thread:$0]  %s3, 1024, %s34, [#allocation5], 64, 64, 4
    $region17: #{residual_block.1} parent=1 // pred_fallthru
      _
    // Predicated region
    $region18: #{residual_block.1} parent=1 // pred_check
      _
    $region19: #{residual_block.1} parent=1 // pred_check_branch
      %41 = sbr.rel (0) target = $region21
    $region20: #{residual_block.1} parent=1 // pred_region
      _
    $region21: #{residual_block.1} parent=1 // pred_fallthru
      _
    // Predicated region
    $region22: #{residual_block.1} parent=1 // pred_check
      _
    $region23: #{residual_block.1} parent=1 // pred_check_branch
      %43 = sbr.rel (0) target = $region25
    $region24: #{residual_block.1} parent=1 // pred_region
      %44 = dma.done [#allocation3], 1024
    $region25: #{residual_block.1} parent=1 // pred_fallthru
      _
    // Predicated region
    $region26: #{residual_block.1} parent=1 // pred_check
      _
    $region27: #{residual_block.1} parent=1 // pred_check_branch
      %46 = sbr.rel (0) target = $region29
    $region28: #{residual_block.1} parent=1 // pred_region
      %47 = dma.done [#allocation5], 1024
    $region29: #{residual_block.1} parent=1 // pred_fallthru
      _
    %v49 = vld [vmem:[%s0] sm:$0xff]
    %v50 = vpack.c.bf16 %v49, %v49
    %v51 = vld [vmem:[#allocation2] sm:$0xf]
    %v52 = vld [vmem:[#allocation2 + $0x4] sm:$0xf]
    %v53 = vld [vmem:[#allocation2 + $0x8] sm:$0xf]
    %v54 = vld [vmem:[#allocation2 + $0xc] sm:$0xf]
    %v55 = vld [vmem:[#allocation2 + $0x10] sm:$0xf]
    %v56 = vld [vmem:[#allocation2 + $0x14] sm:$0xf]
    %v57 = vld [vmem:[#allocation2 + $0x18] sm:$0xf]
    %v58 = vld [vmem:[#allocation2 + $0x1c] sm:$0xf]
    %v59 = vld [vmem:[#allocation2 + $0x20] sm:$0xf]
    %v60 = vld [vmem:[#allocation2 + $0x24] sm:$0xf]
    %v61 = vld [vmem:[#allocation2 + $0x28] sm:$0xf]
    %v62 = vld [vmem:[#allocation2 + $0x2c] sm:$0xf]
    %v63 = vld [vmem:[#allocation2 + $0x30] sm:$0xf]
    %v64 = vld [vmem:[#allocation2 + $0x34] sm:$0xf]
    %v65 = vld [vmem:[#allocation2 + $0x38] sm:$0xf]
    %v66 = vld [vmem:[#allocation2 + $0x3c] sm:$0xf]
    %v67 = vld [vmem:[%s2] sm:$0x1]
    %v69 = vlaneseq
    %v70 = vshrl.u32 %v69, 7
    %v71 = vsub.s32 0, %v70
    %v72 = vrot.slane %v67, %v71
    %v90 = vunpack.c.l.b16 %v51
    %v91 = vunpack.c.l.b16 %v52
    %v92 = vunpack.c.l.b16 %v53
    %v93 = vunpack.c.l.b16 %v54
    %v94 = vunpack.c.l.b16 %v55
    %v95 = vunpack.c.l.b16 %v56
    %v96 = vunpack.c.l.b16 %v57
    %v97 = vunpack.c.l.b16 %v58
    %v98 = vunpack.c.l.b16 %v59
    %v99 = vunpack.c.l.b16 %v60
    %v100 = vunpack.c.l.b16 %v61
    %v101 = vunpack.c.l.b16 %v62
    %v102 = vunpack.c.l.b16 %v63
    %v103 = vunpack.c.l.b16 %v64
    %v104 = vunpack.c.l.b16 %v65
    %v105 = vunpack.c.l.b16 %v66
    %v106 = vpack.c.b16 %v91, %v90
    %v107 = vpack.c.b16 %v93, %v92
    %v108 = vpack.c.b16 %v95, %v94
    %v109 = vpack.c.b16 %v97, %v96
    %v110 = vpack.c.b16 %v99, %v98
    %v111 = vpack.c.b16 %v101, %v100
    %v112 = vpack.c.b16 %v103, %v102
    %v113 = vpack.c.b16 %v105, %v104
    %122 = vmatprep.subr.bf16.mxu0 0
    %123 = vmatpush1.bf16.msra.mxu0 %v113
    %124 = vmatprep.subr.bf16.mxu0 0
    %125 = vmatpush1.bf16.msra.mxu0 %v112
    %126 = vmatprep.subr.bf16.mxu0 0
    %127 = vmatpush1.bf16.msra.mxu0 %v111
    %128 = vmatprep.subr.bf16.mxu0 0
    %129 = vmatpush1.bf16.msra.mxu0 %v110
    %130 = vmatprep.subr.bf16.mxu0 0
    %131 = vmatpush1.bf16.msra.mxu0 %v109
    %132 = vmatprep.subr.bf16.mxu0 0
    %133 = vmatpush1.bf16.msra.mxu0 %v108
    %134 = vmatprep.subr.bf16.mxu0 0
    %135 = vmatpush1.bf16.msra.mxu0 %v107
    %136 = vmatprep.subr.bf16.mxu0 0
    %137 = vmatpush1.bf16.msra.mxu0 %v106
    %138 = vmatprep.subr.bf16.mxu0 0
    %139 = vmatpush2.bf16.msra.mxu0 0
    %140 = vmatprep.subr.bf16.mxu0 0
    %141 = vmatpush2.bf16.msra.mxu0 0
    %142 = vmatprep.subr.bf16.mxu0 0
    %143 = vmatpush2.bf16.msra.mxu0 0
    %144 = vmatprep.subr.bf16.mxu0 0
    %145 = vmatpush2.bf16.msra.mxu0 0
    %146 = vmatprep.subr.bf16.mxu0 0
    %147 = vmatpush2.bf16.msra.mxu0 0
    %148 = vmatprep.subr.bf16.mxu0 0
    %149 = vmatpush2.bf16.msra.mxu0 0
    %150 = vmatprep.subr.bf16.mxu0 0
    %151 = vmatpush2.bf16.msra.mxu0 0
    %152 = vmatprep.subr.bf16.mxu0 0
    %153 = vmatpush2.bf16.msra.mxu0 0
    %154 = vmatprep.mubr.bf16.mxu0 0
    %155 = vmatmul.mubr.bf16.gmra.mxu0 %v50
    %v156 = vpop.f32.mrf.mxu0
    %v157 = vadd.f32 %v72, %v156
    %v158 = vpop.f32.mrf.mxu0
    %v159 = vpop.f32.mrf.mxu0
    %v160 = vpop.f32.mrf.mxu0
    %161 = vdwg.mxu0
    %v162 = vmax.f32 %v157, 0.0
    %v163 = vpack.c.bf16 %v162, %v162
    %v164 = vld [vmem:[#allocation4] sm:$0xf]
    %v165 = vld [vmem:[#allocation4 + $0x4] sm:$0xf]
    %v166 = vld [vmem:[#allocation4 + $0x8] sm:$0xf]
    %v167 = vld [vmem:[#allocation4 + $0xc] sm:$0xf]
    %v168 = vld [vmem:[#allocation4 + $0x10] sm:$0xf]
    %v169 = vld [vmem:[#allocation4 + $0x14] sm:$0xf]
    %v170 = vld [vmem:[#allocation4 + $0x18] sm:$0xf]
    %v171 = vld [vmem:[#allocation4 + $0x1c] sm:$0xf]
    %v172 = vld [vmem:[#allocation4 + $0x20] sm:$0xf]
    %v173 = vld [vmem:[#allocation4 + $0x24] sm:$0xf]
    %v174 = vld [vmem:[#allocation4 + $0x28] sm:$0xf]
    %v175 = vld [vmem:[#allocation4 + $0x2c] sm:$0xf]
    %v176 = vld [vmem:[#allocation4 + $0x30] sm:$0xf]
    %v177 = vld [vmem:[#allocation4 + $0x34] sm:$0xf]
    %v178 = vld [vmem:[#allocation4 + $0x38] sm:$0xf]
    %v179 = vld [vmem:[#allocation4 + $0x3c] sm:$0xf]
    %v196 = vunpack.c.l.b16 %v164
    %v197 = vunpack.c.l.b16 %v165
    %v198 = vunpack.c.l.b16 %v166
    %v199 = vunpack.c.l.b16 %v167
    %v200 = vunpack.c.l.b16 %v168
    %v201 = vunpack.c.l.b16 %v169
    %v202 = vunpack.c.l.b16 %v170
    %v203 = vunpack.c.l.b16 %v171
    %v204 = vunpack.c.l.b16 %v172
    %v205 = vunpack.c.l.b16 %v173
    %v206 = vunpack.c.l.b16 %v174
    %v207 = vunpack.c.l.b16 %v175
    %v208 = vunpack.c.l.b16 %v176
    %v209 = vunpack.c.l.b16 %v177
    %v210 = vunpack.c.l.b16 %v178
    %v211 = vunpack.c.l.b16 %v179
    %v212 = vpack.c.b16 %v197, %v196
    %v213 = vpack.c.b16 %v199, %v198
    %v214 = vpack.c.b16 %v201, %v200
    %v215 = vpack.c.b16 %v203, %v202
    %v216 = vpack.c.b16 %v205, %v204
    %v217 = vpack.c.b16 %v207, %v206
    %v218 = vpack.c.b16 %v209, %v208
    %v219 = vpack.c.b16 %v211, %v210
    %228 = vmatprep.subr.bf16.mxu0 0
    %229 = vmatpush1.bf16.msra.mxu0 %v219
    %230 = vmatprep.subr.bf16.mxu0 0
    %231 = vmatpush1.bf16.msra.mxu0 %v218
    %232 = vmatprep.subr.bf16.mxu0 0
    %233 = vmatpush1.bf16.msra.mxu0 %v217
    %234 = vmatprep.subr.bf16.mxu0 0
    %235 = vmatpush1.bf16.msra.mxu0 %v216
    %236 = vmatprep.subr.bf16.mxu0 0
    %237 = vmatpush1.bf16.msra.mxu0 %v215
    %238 = vmatprep.subr.bf16.mxu0 0
    %239 = vmatpush1.bf16.msra.mxu0 %v214
    %240 = vmatprep.subr.bf16.mxu0 0
    %241 = vmatpush1.bf16.msra.mxu0 %v213
    %242 = vmatprep.subr.bf16.mxu0 0
    %243 = vmatpush1.bf16.msra.mxu0 %v212
    %244 = vmatprep.subr.bf16.mxu0 0
    %245 = vmatpush2.bf16.msra.mxu0 0
    %246 = vmatprep.subr.bf16.mxu0 0
    %247 = vmatpush2.bf16.msra.mxu0 0
    %248 = vmatprep.subr.bf16.mxu0 0
    %249 = vmatpush2.bf16.msra.mxu0 0
    %250 = vmatprep.subr.bf16.mxu0 0
    %251 = vmatpush2.bf16.msra.mxu0 0
    %252 = vmatprep.subr.bf16.mxu0 0
    %253 = vmatpush2.bf16.msra.mxu0 0
    %254 = vmatprep.subr.bf16.mxu0 0
    %255 = vmatpush2.bf16.msra.mxu0 0
    %256 = vmatprep.subr.bf16.mxu0 0
    %257 = vmatpush2.bf16.msra.mxu0 0
    %258 = vmatprep.subr.bf16.mxu0 0
    %259 = vmatpush2.bf16.msra.mxu0 0
    %260 = vmatprep.mubr.bf16.mxu0 0
    %261 = vmatmul.mubr.bf16.gmra.mxu0 %v163
    %v262 = vpop.f32.mrf.mxu0
    %v263 = vadd.f32 0.0, %v262
    %v264 = vpop.f32.mrf.mxu0
    %v265 = vpop.f32.mrf.mxu0
    %v266 = vpop.f32.mrf.mxu0
    %267 = vdwg.mxu0
    %v268 = vadd.f32 %v49, %v263
    %v269 = vld [vmem:[%s4] sm:$0x1]
    %v271 = vlaneseq
    %v272 = vshrl.u32 %v271, 7
    %v273 = vsub.s32 0, %v272
    %v274 = vrot.slane %v269, %v273
    %v276 = vadd.f32 %v268, %v274
    %277 = vst [vmem:[%s5] sm:$0xff] %v276
    // Predicated region
    $region30: #{residual_block.1} parent=1 // pred_check
      _
    $region31: #{residual_block.1} parent=1 // pred_check_branch
      %279 = sbr.rel (0) target = $region33
    $region32: #{residual_block.1} parent=1 // pred_region
      _
    $region33: #{residual_block.1} parent=1 // pred_fallthru
      _
    // Predicated region
    $region34: #{residual_block.1} parent=1 // pred_check
      _
    $region35: #{residual_block.1} parent=1 // pred_check_branch
      %281 = sbr.rel (0) target = $region37
    $region36: #{residual_block.1} parent=1 // pred_region
      _
    $region37: #{residual_block.1} parent=1 // pred_fallthru
      _
    %282 = vsyncpa [#allocation3], 1
    %283 = vsyncpa [#allocation5], 1

</llo_original>
